<compile_context>
chip_gen: v5e
topology: v5e:2x2
jax: 0.10.0
libtpu: 0.0.40
codegen_flags: <defaults>
</compile_context>

<pallas_src>
import jax
import jax.numpy as jnp
from jax.experimental import pallas as pl
from jax.experimental.pallas import tpu as pltpu

_LANES = 128
_SUBLANES = 8
_GROUP = _SUBLANES * _LANES          # 1024 elements per (8,128) group
_MAX_TILE_GROUPS = 512               # 512 * 1024 * 4B = 2 MiB f32 per grid step
_NUM_CORE_SPLITS = 2                 # v7x megacore split; no-op on v5e/v6e


def _elem_sq(x):
    return x * x


def _elem_id(x):
    return x


def _elem_abs(x):
    return jnp.abs(x)


def _elem_softplus(x):
    # BCEWithLogitsLoss vs. a zero target == mean(softplus(x)); stable form.
    return jnp.maximum(x, 0.0) + jnp.log1p(jnp.exp(-jnp.abs(x)))


_ELEM_FNS = {"sq": _elem_sq, "id": _elem_id, "abs": _elem_abs,
             "softplus": _elem_softplus}

_MODE_TO_ELEM = {"norm": "sq", "l2": "sq", "abs_l2": "sq", "mse": "sq",
                 "mean": "id", "abs_mean": "abs", "bce": "softplus"}


def _make_kernel(elem_kind, num_groups):
    """Kernel computing sum(elem_fn(x)) into a resident (8,128) f32 block."""
    elem_fn = _ELEM_FNS[elem_kind]

    def kernel(x_ref, acc_ref):
        j = pl.program_id(1)

        @pl.when(j == 0)
        def _():
            acc_ref[...] = jnp.zeros_like(acc_ref)

        tile_groups = x_ref.shape[0]
        # Logical tile index (un-clamped): the input index_map clamps the DMA
        # source into range, but masking must use the logical position so a
        # clamped (duplicate) tile contributes exactly zero.
        tile_idx = pl.program_id(0) * pl.num_programs(1) + j
        rem_groups = num_groups - tile_idx * tile_groups

        x = x_ref[...].astype(jnp.float32)
        v = elem_fn(x)
        # Group-granular mask (3 VPU ops per vreg): kills (a) Pallas padding of
        # a partial last block and (b) out-of-range tiles on the second core.
        g = jax.lax.broadcasted_iota(jnp.int32, v.shape, 0)
        v = jnp.where(g < rem_groups, v, 0.0)
        acc_ref[...] += jnp.sum(v, axis=0)          # leading-axis reduce: VPU adds only

    return kernel


def _reduce_sum(x, elem_kind, *, max_tile_groups=_MAX_TILE_GROUPS):
    """sum(elem_fn(x)) over all elements via the Pallas kernel (f32 scalar)."""
    n = x.size
    flat = x.reshape(-1)                             # free; keeps native dtype
    pad = (-n) % _GROUP
    if pad:
        # TODO(synk): padding costs one extra HBM copy, but only when numel is
        # not a multiple of 1024; typical conv activations take the copy-free path.
        flat = jnp.pad(flat, (0, pad))
    num_groups = flat.shape[0] // _GROUP
    x3d = flat.reshape(num_groups, _SUBLANES, _LANES)

    tile_groups = min(max_tile_groups, num_groups)
    num_tiles = pl.cdiv(num_groups, tile_groups)
    tiles_per_core = pl.cdiv(num_tiles, _NUM_CORE_SPLITS)

    def in_map(p, j):
        # Clamp so the DMA source stays in range when the tile count is odd;
        # the duplicated tile is fully masked in-kernel (rem_groups <= 0).
        return (jnp.minimum(p * tiles_per_core + j, num_tiles - 1), 0, 0)

    partials = pl.pallas_call(
        _make_kernel(elem_kind, num_groups),
        out_shape=jax.ShapeDtypeStruct(
            (_NUM_CORE_SPLITS, _SUBLANES, _LANES), jnp.float32),
        grid_spec=pltpu.PrefetchScalarGridSpec(
            num_scalar_prefetch=0,
            grid=(_NUM_CORE_SPLITS, tiles_per_core),
            in_specs=[pl.BlockSpec((tile_groups, _SUBLANES, _LANES), in_map)],
            out_specs=pl.BlockSpec((None, _SUBLANES, _LANES),
                                   lambda p, j: (p, 0, 0)),
        ),
        compiler_params=pltpu.CompilerParams(
            dimension_semantics=("parallel", "arbitrary")),
        cost_estimate=pl.CostEstimate(
            flops=2 * n,
            transcendentals=2 * n if elem_kind == "softplus" else 0,
            bytes_accessed=n * x.dtype.itemsize
            + _NUM_CORE_SPLITS * _SUBLANES * _LANES * 4),
    )(x3d)

    total = jnp.sum(partials)
    if pad and elem_kind == "softplus":
        # Each explicit zero-pad element contributes softplus(0) = log(2).
        total = total - jnp.float32(pad) * jnp.log(jnp.float32(2.0))
    return total


class DreamLossMode:
    """JAX/Pallas port of neural_dream loss_layers.DreamLossMode forward()."""

    _VALID = ("norm", "mean", "l2", "mse", "bce", "abs_mean", "abs_l2")

    def __init__(self, loss_mode, use_fft=(False, 25), r=1):
        self.loss_mode_string = loss_mode.lower()
        if self.loss_mode_string not in self._VALID:
            raise ValueError(f"unknown loss mode: {loss_mode}")
        self.use_fft = use_fft[0]
        self.r = r
        # TODO(synk): dream_utils.FFTTensor (rfft -> low-frequency blocking ->
        # irfft) has no clean Pallas equivalent; use_fft=True is not implemented.
        if self.use_fft:
            raise NotImplementedError("FFT preprocessing path not implemented")
        self._elem_kind = _MODE_TO_ELEM[self.loss_mode_string]

    def __call__(self, x):
        mode = self.loss_mode_string
        if x.size == 0:
            # Degenerate empty input (matches torch: norm -> 0, mean-style -> nan).
            xf = x.astype(jnp.float32)
            if mode in ("norm", "l2", "abs_l2"):
                return jnp.sqrt(jnp.sum(xf * xf))
            return jnp.mean(xf)
        s = _reduce_sum(x, self._elem_kind)
        if mode in ("norm", "l2", "abs_l2"):      # |x|^2 == x^2 -> identical result
            return jnp.sqrt(s)
        # mean / abs_mean / mse (zero target) / bce (BCEWithLogits, zero target)
        return s / jnp.float32(x.size)

    forward = __call__


def _reference(x, mode):
    x = x.astype(jnp.float32)
    if mode in ("norm", "l2", "abs_l2"):
        return jnp.sqrt(jnp.sum(x * x))
    if mode == "mean":
        return jnp.mean(x)
    if mode == "abs_mean":
        return jnp.mean(jnp.abs(x))
    if mode == "mse":
        return jnp.mean(x * x)
    if mode == "bce":
        return jnp.mean(jnp.maximum(x, 0.0) + jnp.log1p(jnp.exp(-jnp.abs(x))))
    raise ValueError(mode)


if __name__ == "__main__":
    key = jax.random.PRNGKey(0)
    modes = ["norm", "mean", "l2", "mse", "bce", "abs_mean", "abs_l2"]

    k1, k2, k3 = jax.random.split(key, 3)
    # NCHW conv-activation-like input: copy-free (numel % 1024 == 0) path.
    x_main = jax.random.normal(k1, (2, 4, 16, 16), dtype=jnp.float32)
    # Ragged input: exercises the zero-pad + in-kernel group-masking path.
    x_ragged = jax.random.normal(k2, (2, 3, 5, 7), dtype=jnp.float32)

    for x in (x_main, x_ragged):
        for mode in modes:
            out = jax.block_until_ready(DreamLossMode(mode, (False, 25), 1)(x))
            ref = _reference(x, mode)
            assert jnp.allclose(out, ref, rtol=1e-5, atol=1e-5), (
                f"mode {mode} shape {x.shape}: kernel={out} ref={ref}")

    # Multi-tile, two-core split, and odd-tile-count clamp paths, forced by
    # shrinking the tile to one (8,128) group.
    ref_fns = (
        ("sq", lambda a: jnp.sum(a * a)),
        ("id", jnp.sum),
        ("abs", lambda a: jnp.sum(jnp.abs(a))),
        ("softplus", lambda a: jnp.sum(jnp.maximum(a, 0.0)
                                       + jnp.log1p(jnp.exp(-jnp.abs(a))))),
    )
    for shape in ((4, 4, 16, 16),   # 4 groups -> grid (2, 2), even split
                  (3, 4, 16, 16)):  # 3 groups -> odd tile count, clamped tile
        xs = jax.random.normal(k3, shape, dtype=jnp.float32)
        for kind, fn in ref_fns:
            got = jax.block_until_ready(
                _reduce_sum(xs, kind, max_tile_groups=1))
            want = fn(xs.astype(jnp.float32))
            assert jnp.allclose(got, want, rtol=1e-5, atol=1e-5), (
                f"{kind} {shape}: kernel={got} ref={want}")

    print("KERNEL_OK")
</pallas_src>

<mosaic_0001>
module attributes {stable_mosaic.version = 11 : i64} {
  func.func @kernel(%arg0: i32, %arg1: i32, %arg2: memref<2x8x128xf32, #tpu.memory_space<vmem>>, %arg3: memref<1x8x128xf32, #tpu.memory_space<vmem>>) attributes {dimension_semantics = [#tpu.dimension_semantics<parallel>, #tpu.dimension_semantics<arbitrary>], iteration_bounds = array<i64: 2, 1>, scalar_prefetch = 0 : i64, scratch_operands = 0 : i64, tpu.core_type = #tpu.core_type<tc>, window_params = [{transform_indices = @transform_0, window_bounds = array<i64: 2, 8, 128>}, {transform_indices = @transform_1, window_bounds = array<i64: 1, 8, 128>}]} {
    %c0_i32 = arith.constant 0 : i32
    %0 = arith.cmpi eq, %arg1, %c0_i32 : i32
    %1 = arith.extui %0 : i1 to i32
    %c0_i32_0 = arith.constant 0 : i32
    %2 = arith.cmpi ne, %1, %c0_i32_0 : i32
    scf.if %2 {
      %cst_11 = arith.constant 0.000000e+00 : f32
      %21 = vector.broadcast %cst_11 : f32 to vector<8x128xf32>
      %c0_12 = arith.constant 0 : index
      %c0_13 = arith.constant 0 : index
      %c0_14 = arith.constant 0 : index
      %22 = vector.load %arg3[%c0_12, %c0_13, %c0_14] : memref<1x8x128xf32, #tpu.memory_space<vmem>>, vector<1x8x128xf32>
      %23 = vector.shape_cast %22 : vector<1x8x128xf32> to vector<8x128xf32>
      %24 = vector.shape_cast %21 : vector<8x128xf32> to vector<1x8x128xf32>
      tpu.vector_store %arg3[%c0_12, %c0_13, %c0_14], %24 {strides = array<i32>} : memref<1x8x128xf32, #tpu.memory_space<vmem>>, vector<1x8x128xf32>,
    } else {
    }
    %c1_i32 = arith.constant 1 : i32
    %3 = arith.muli %arg0, %c1_i32 : i32
    %4 = arith.addi %3, %arg1 : i32
    %c2_i32 = arith.constant 2 : i32
    %5 = arith.muli %4, %c2_i32 : i32
    %c2_i32_1 = arith.constant 2 : i32
    %6 = arith.subi %c2_i32_1, %5 : i32
    %c0 = arith.constant 0 : index
    %c0_2 = arith.constant 0 : index
    %c0_3 = arith.constant 0 : index
    %7 = vector.load %arg2[%c0, %c0_2, %c0_3] : memref<2x8x128xf32, #tpu.memory_space<vmem>>, vector<2x8x128xf32>
    %8 = arith.mulf %7, %7 : vector<2x8x128xf32>
    %9 = tpu.iota {dimensions = array<i32: 0>} : vector<2x8x128xi32>
    %10 = vector.broadcast %6 : i32 to vector<2x8x128xi32>
    %11 = arith.cmpi slt, %9, %10 : vector<2x8x128xi32>
    %cst = arith.constant 0.000000e+00 : f32
    %12 = vector.broadcast %cst : f32 to vector<2x8x128xf32>
    %13 = arith.select %11, %8, %12 : vector<2x8x128xi1>, vector<2x8x128xf32>
    %c0_4 = arith.constant 0 : index
    %c0_5 = arith.constant 0 : index
    %c0_6 = arith.constant 0 : index
    %14 = vector.load %arg3[%c0_4, %c0_5, %c0_6] : memref<1x8x128xf32, #tpu.memory_space<vmem>>, vector<1x8x128xf32>
    %15 = vector.shape_cast %14 : vector<1x8x128xf32> to vector<8x128xf32>
    %cst_7 = arith.constant dense<0.000000e+00> : vector<8x128xf32>
    %16 = vector.multi_reduction <add>, %13, %cst_7 [0] : vector<2x8x128xf32> to vector<8x128xf32>
    %17 = arith.addf %15, %16 : vector<8x128xf32>
    %c0_8 = arith.constant 0 : index
    %c0_9 = arith.constant 0 : index
    %c0_10 = arith.constant 0 : index
    %18 = vector.load %arg3[%c0_8, %c0_9, %c0_10] : memref<1x8x128xf32, #tpu.memory_space<vmem>>, vector<1x8x128xf32>
    %19 = vector.shape_cast %18 : vector<1x8x128xf32> to vector<8x128xf32>
    %20 = vector.shape_cast %17 : vector<8x128xf32> to vector<1x8x128xf32>
    tpu.vector_store %arg3[%c0_8, %c0_9, %c0_10], %20 {strides = array<i32>} : memref<1x8x128xf32, #tpu.memory_space<vmem>>, vector<1x8x128xf32>,
    return
  }
  func.func @transform_0(%arg0: i32, %arg1: i32) -> (i32, i32, i32) {
    %c1_i32 = arith.constant 1 : i32
    %0 = arith.muli %arg0, %c1_i32 : i32
    %1 = arith.addi %0, %arg1 : i32
    %c0_i32 = arith.constant 0 : i32
    %2 = arith.minsi %1, %c0_i32 : i32
    %c0_i32_0 = arith.constant 0 : i32
    %c0_i32_1 = arith.constant 0 : i32
    %c0_i32_2 = arith.constant 0 : i32
    return %2, %c0_i32_0, %c0_i32_1 : i32, i32, i32
  }
  func.func @transform_1(%arg0: i32, %arg1: i32) -> (i32, i32, i32) {
    %c0_i32 = arith.constant 0 : i32
    %c0_i32_0 = arith.constant 0 : i32
    %c0_i32_1 = arith.constant 0 : i32
    return %arg0, %c0_i32, %c0_i32_0 : i32, i32, i32
  }
}

</mosaic_0001>

<llo_original>
// kernel: tpu_custom_call.1
$region0: #{tpu_custom_call.1}
  #allocation0 [shape = 'u32[]', space=smem, size = 0x4, offset = 0x4, fixed_abs, tag = 'smem constant byte address 0x4 - core index']
  #allocation1 [shape = 'u32[72,128]{1,0:T(1,128)}', space=vmem, size = 0x9000, scoped, tag = 'internal scratch']
  %s0 = inlined_call_operand.hbm [shape: f32[2,8,128], index: 0, kind: input, shape index: {}]
  %s1 = inlined_call_operand.hbm [shape: f32[2,8,128], index: 1, kind: output, shape index: {}]
  %s2 = sld [smem:[#allocation0]]
  $region45: #{tpu_custom_call.1} parent=0
    _
  %s4 = ssub.s32 1, %s2
  %s5 = scalar_select 0, %s4, %s2
  $region1: #{tpu_custom_call.1} parent=0
    #allocation2 [shape = 'u8[16384]{0}', space=vmem, size = 0x4000, scoped, tag = 'input window, operand 0']
    #allocation3 [shape = 's32[2]{0}', space=sflag, size = 0x8, scoped, tag = 'scoped memory for tpu_custom_call.1']
    #allocation4 [shape = 's32[2]{0}', space=sflag, size = 0x8, scoped, tag = 'scoped memory for tpu_custom_call.1']
    #allocation5 [shape = 'u8[8192]{0}', space=vmem, size = 0x2000, scoped, tag = 'output window, operand 0']
    %6 = vsyncpa [#allocation3], 0
    %s7 = scalar_lea.sflag [#allocation3], 1
    %8 = vsyncpa %s7, 0
    %9 = vsyncpa [#allocation4], 0
    %s10 = scalar_lea.sflag [#allocation4], 1
    %11 = vsyncpa %s10, 0
    loop: start=0, step=1, limit=4
    $region2: #{tpu_custom_call.1} parent=1 // loop_pre_header
      _
    $region3: #{tpu_custom_call.1} parent=1 // loop_header
      %s13 = sphi 0, %s17
      %p14 = scmp.ge.s32.totalorder %s13, 4
      %s20 = sphi 0, %s32
      %s21 = sphi 0, %s28
      %s22 = sphi 0, %s20
      %s23 = sphi 0, %s21
      %s24 = sphi 0, %s22
      %s25 = sphi 0, %s23
      %s41 = sphi 0, %s43
      %s44 = sphi 0, %s41
      %s45 = sphi 0, %s44
      %s61 = sphi 0, %s45
      %s67 = sphi 0, %s69
      %s70 = sphi 0, %s67
      %s71 = sphi 0, %s70
      %s87 = sphi 0, %s71
    $region4: #{tpu_custom_call.1} parent=1 // loop_header_branch
      %16 = sbr.rel (%p14) target = $region8
    $region5: #{tpu_custom_call.1} parent=1 // loop_body
      %s18 = ssub.s32 %s13, 1
      %s19 = ssub.s32 %s13, 2
      %s26 = sadd.s32 1, %s21
      %p27 = scmp.ge.s32.totalorder %s26, 1
      %s28 = scalar_select %p27, 0, %s26
      %s29 = sadd.s32 1, %s20
      %s30 = scalar_select %p27, %s29, %s20
      %p31 = scmp.ge.s32.totalorder %s30, 2
      %s32 = scalar_select %p31, 0, %s30
      %s33 = sadd.s32 %s20, %s21
      %p34 = scmp.lt.s32.totalorder %s33, 0
      %s35 = scalar_select %p34, %s33, 0
      %s36 = sadd.s32 %s32, %s28
      %p37 = scmp.lt.s32.totalorder %s36, 0
      %s38 = scalar_select %p37, %s36, 0
      %s39 = ssub.s32 %s35, %s38
      %p40 = scmp.eq.s32.totalorder %s39, 0
      %s42 = sadd.s32 %s41, 1
      %s43 = scalar_select %p40, %s41, %s42
      %p46 = pneg %p40
      %p47 = scmp.eq.s32.totalorder %s13, 1
      %p48 = por %p46, %p47
      %p49 = scmp.ne.s32.totalorder %s41, %s44
      %p50 = scmp.eq.s32.totalorder %s13, 0
      %p51 = por %p49, %p50
      %p52 = scmp.ne.s32.totalorder %s41, %s44
      %p53 = scmp.eq.s32.totalorder %s18, 1
      %p54 = por %p52, %p53
      %p55 = scmp.ne.s32.totalorder %s44, %s45
      %p56 = scmp.eq.s32.totalorder %s18, 0
      %p57 = por %p55, %p56
      %p58 = scmp.ne.s32.totalorder %s44, %s45
      %p59 = scmp.eq.s32.totalorder %s19, 1
      %p60 = por %p58, %p59
      %p62 = scmp.ne.s32.totalorder %s45, %s61
      %p63 = scmp.eq.s32.totalorder %s19, 0
      %p64 = por %p62, %p63
      %s65 = ssub.s32 %s20, %s32
      %p66 = scmp.eq.s32.totalorder %s65, 0
      %s68 = sadd.s32 %s67, 1
      %s69 = scalar_select %p66, %s67, %s68
      %p72 = pneg %p66
      %p73 = scmp.eq.s32.totalorder %s13, 1
      %p74 = por %p72, %p73
      %p75 = scmp.ne.s32.totalorder %s67, %s70
      %p76 = scmp.eq.s32.totalorder %s13, 0
      %p77 = por %p75, %p76
      %p78 = scmp.ne.s32.totalorder %s67, %s70
      %p79 = scmp.eq.s32.totalorder %s18, 1
      %p80 = por %p78, %p79
      %p81 = scmp.ne.s32.totalorder %s70, %s71
      %p82 = scmp.eq.s32.totalorder %s18, 0
      %p83 = por %p81, %p82
      %p84 = scmp.ne.s32.totalorder %s70, %s71
      %p85 = scmp.eq.s32.totalorder %s19, 1
      %p86 = por %p84, %p85
      %p88 = scmp.ne.s32.totalorder %s71, %s87
      %p89 = scmp.eq.s32.totalorder %s19, 0
      %p90 = por %p88, %p89
      %p91 = scmp.le.s32.totalorder 1, %s13
      %p92 = scmp.lt.s32.totalorder %s13, 3
      %p93 = pnand %p91, %p92
      %p94 = pneg %p93
      // Predicated region
      $region9: #{tpu_custom_call.1} parent=5 // pred_check
        _
      $region10: #{tpu_custom_call.1} parent=5 // pred_check_branch
        %96 = sbr.rel (%p93) target = $region12
      $region11: #{tpu_custom_call.1} parent=5 // pred_region
        %s97 = ssub.s32 %s13, 1
      $region12: #{tpu_custom_call.1} parent=5 // pred_fallthru
        _
      %p98 = scmp.lt.s32.totalorder %s13, 2
      // Predicated region
      $region13: #{tpu_custom_call.1} parent=5 // pred_check
        %p99 = pneg %p98
      $region14: #{tpu_custom_call.1} parent=5 // pred_check_branch
        %101 = sbr.rel (%p99) target = $region16
      $region15: #{tpu_custom_call.1} parent=5 // pred_region
        // Predicated region
        $region17: #{tpu_custom_call.1} parent=15 // pred_check
          %p102 = pneg %p51
        $region18: #{tpu_custom_call.1} parent=15 // pred_check_branch
          %104 = sbr.rel (%p102) target = $region20
        $region19: #{tpu_custom_call.1} parent=15 // pred_region
          %s105 = sand.u32 %s41, 1
          %s106 = scalar_lea.sflag [#allocation3], %s105
          %s107 = sand.u32 %s41, 1
          %s108 = smul.addr %s107, 16
          %s109 = scalar_lea.vmem [#allocation2], %s108
          %s110 = sadd.s32 %s20, %s21
          %p111 = scmp.lt.s32.totalorder %s110, 0
          %s112 = scalar_select %p111, %s110, 0
          %s113 = smul.u32 2, %s112
          %115 = vsyncadd %s106, 0
          %s116 = smul.addr %s113, 8
          %s117 = scalar_lea.hbm %s0, %s116
          %s118 = sshll.u32 %s117, 4
          %s119 = int_to_ptr.hbm [resolvable:$true] %s118
          %s120 = sshll.u32 %s109, 4
          %s121 = int_to_ptr.vmem [resolvable:$true] %s120
          %126 = dma.hbm_to_vmem [thread:$0]  %s119, 256, %s121, %s106, 128, 128, 8
        $region20: #{tpu_custom_call.1} parent=15 // pred_fallthru
          _
      $region16: #{tpu_custom_call.1} parent=5 // pred_fallthru
        _
      %p127 = scmp.le.s32.totalorder 1, %s13
      %p128 = scmp.lt.s32.totalorder %s13, 3
      %p129 = pnand %p127, %p128
      %p130 = pneg %p129
      // Predicated region
      $region21: #{tpu_custom_call.1} parent=5 // pred_check
        _
      $region22: #{tpu_custom_call.1} parent=5 // pred_check_branch
        %132 = sbr.rel (%p129) target = $region24
      $region23: #{tpu_custom_call.1} parent=5 // pred_region
        %s133 = ssub.s32 %s13, 1
        %s134 = sand.u32 %s44, 1
        %s135 = scalar_lea.sflag [#allocation3], %s134
        %s136 = sand.u32 %s44, 1
        %s137 = smul.addr %s136, 16
        %s138 = scalar_lea.vmem [#allocation2], %s137
        // Predicated region
        $region25: #{tpu_custom_call.1} parent=23 // pred_check
          %p139 = pneg %p57
        $region26: #{tpu_custom_call.1} parent=23 // pred_check_branch
          %141 = sbr.rel (%p139) target = $region28
        $region27: #{tpu_custom_call.1} parent=23 // pred_region
          %143 = dma.done %s135, 256
        $region28: #{tpu_custom_call.1} parent=23 // pred_fallthru
          _
        %s144 = sand.u32 %s44, 1
        %s145 = scalar_lea.sflag [#allocation3], %s144
        %s146 = sand.u32 %s44, 1
        %s147 = smul.addr %s146, 16
        %s148 = scalar_lea.vmem [#allocation2], %s147
        %p149 = pneg %p57
        %p150 = pneg %p54
        %p151 = pneg %p83
        %p152 = pneg %p80
        %s153 = sand.u32 %s70, 1
        %s154 = scalar_lea.sflag [#allocation4], %s153
        %s155 = sand.u32 %s70, 1
        %s156 = smul.addr %s155, 8
        %s157 = scalar_lea.vmem [#allocation5], %s156
        %s158 = sadd.s32 %s22, %s23
        %p159 = scmp.lt.s32.totalorder %s158, 0
        %s160 = scalar_select %p159, %s158, 0
        %s161 = smul.u32 2, %s160
        %p162 = scmp.eq.s32.totalorder %s23, 0
        // Predicated region
        $region29: #{tpu_custom_call.1} parent=23 // pred_check
          %p163 = pneg %p162
        $region30: #{tpu_custom_call.1} parent=23 // pred_check_branch
          %165 = sbr.rel (%p163) target = $region32
        $region31: #{tpu_custom_call.1} parent=23 // pred_region
          %166 = vst [vmem:[%s157] sm:$0xff] 0.0
        $region32: #{tpu_custom_call.1} parent=23 // pred_fallthru
          _
        %s167 = sadd.s32 %s22, %s23
        %s168 = smul.u32 %s167, 2
        %s169 = ssub.s32 2, %s168
        %v170 = vld [vmem:[%s138] sm:$0xff]
        %v171 = vld [vmem:[%s138 + $0x8] sm:$0xff]
        %v172 = vmul.f32 %v170, %v170
        %v173 = vmul.f32 %v171, %v171
        %v174 = vstv %s169
        %vm175 = vcmp.gt.s32.totalorder %v174, 0
        %vm176 = vcmp.gt.s32.totalorder %v174, 1
        %v177 = vsel %vm175, %v172, 0.0
        %v178 = vsel %vm176, %v173, 0.0
        %v179 = vld [vmem:[%s157] sm:$0xff]
        %v180 = vadd.f32 %v177, %v178
        %v181 = vadd.f32 %v179, %v180
        %182 = vst [vmem:[%s157] sm:$0xff] %v181
        %s183 = sand.u32 %s70, 1
        %s184 = scalar_lea.sflag [#allocation4], %s183
        %s185 = sand.u32 %s70, 1
        %s186 = smul.addr %s185, 8
        %s187 = scalar_lea.vmem [#allocation5], %s186
        // Predicated region
        $region33: #{tpu_custom_call.1} parent=23 // pred_check
          %p188 = pneg %p80
        $region34: #{tpu_custom_call.1} parent=23 // pred_check_branch
          %190 = sbr.rel (%p188) target = $region36
        $region35: #{tpu_custom_call.1} parent=23 // pred_region
          %192 = vsyncadd %s184, 0
          %s193 = smul.addr %s22, 8
          %s194 = scalar_lea.hbm %s1, %s193
          %s196 = sshll.u32 %s187, 4
          %s197 = int_to_ptr.vmem [resolvable:$true] %s196
          %s198 = sshll.u32 %s194, 4
          %s199 = int_to_ptr.hbm [resolvable:$true] %s198
          %201 = dma.vmem_to_hbm [thread:$0]  %s197, 128, %s199, %s184
        $region36: #{tpu_custom_call.1} parent=23 // pred_fallthru
          _
      $region24: #{tpu_custom_call.1} parent=5 // pred_fallthru
        _
      %p202 = scmp.le.s32.totalorder 2, %s13
      // Predicated region
      $region37: #{tpu_custom_call.1} parent=5 // pred_check
        %p203 = pneg %p202
      $region38: #{tpu_custom_call.1} parent=5 // pred_check_branch
        %205 = sbr.rel (%p203) target = $region40
      $region39: #{tpu_custom_call.1} parent=5 // pred_region
        %s206 = ssub.s32 %s13, 2
        // Predicated region
        $region41: #{tpu_custom_call.1} parent=39 // pred_check
          %p207 = pneg %p86
        $region42: #{tpu_custom_call.1} parent=39 // pred_check_branch
          %209 = sbr.rel (%p207) target = $region44
        $region43: #{tpu_custom_call.1} parent=39 // pred_region
          %s210 = sand.u32 %s71, 1
          %s211 = scalar_lea.sflag [#allocation4], %s210
          %s212 = sand.u32 %s71, 1
          %s213 = smul.addr %s212, 8
          %s214 = scalar_lea.vmem [#allocation5], %s213
          %216 = dma.done %s211, 128
        $region44: #{tpu_custom_call.1} parent=39 // pred_fallthru
          _
      $region40: #{tpu_custom_call.1} parent=5 // pred_fallthru
        _
    $region6: #{tpu_custom_call.1} parent=1 // loop_footer
      %s17 = sadd.s32 1, %s13
    $region7: #{tpu_custom_call.1} parent=1 // loop_footer_branch
      %12 = sbr.rel target = $region3
    $region8: #{tpu_custom_call.1} parent=1 // loop_exit
      _
    %217 = vsyncpa [#allocation3], 1
    %s218 = scalar_lea.sflag [#allocation3], 1
    %219 = vsyncpa %s218, 1
    %220 = vsyncpa [#allocation4], 1
    %s221 = scalar_lea.sflag [#allocation4], 1
    %222 = vsyncpa %s221, 1

</llo_original>
